<compile_context>
chip_gen: v5e
topology: v5e:2x2
jax: 0.10.0
libtpu: 0.0.40
codegen_flags: <defaults>
</compile_context>

<pallas_src>
import math

import jax
import jax.numpy as jnp
from jax.experimental import pallas as pl
from jax.experimental.pallas import tpu as pltpu


def _round_up(n, m):
    return ((n + m - 1) // m) * m


def _mlp_kernel(x_ref, w1_ref, b1_ref, w2_ref, b2_ref, o_ref):
    # Layer 1: Linear + ReLU  (MXU matmul, f32 accumulate; VPU elementwise).
    h = jnp.dot(x_ref[...], w1_ref[...], preferred_element_type=jnp.float32)
    h = jnp.maximum(h + b1_ref[...], 0.0)                 # (TB, H) + (1, H)
    # Layer 2: Linear + Sigmoid (sigmoid exp goes to the EUP slot).
    y = jnp.dot(h.astype(w2_ref.dtype), w2_ref[...],
                preferred_element_type=jnp.float32)
    y = y + b2_ref[...]                                   # (TB, N) + (1, N)
    o_ref[...] = jax.nn.sigmoid(y).astype(o_ref.dtype)


def mlp_forward(x, w1_t, b1, w2_t, b2, *, block_batch=4096):
    """x: (B, D_in); w1_t: (D_in, H); b1: (1, H); w2_t: (H, D_out); b2: (1, D_out)."""
    B, d_in = x.shape
    hidden = w1_t.shape[1]
    out_dim = w2_t.shape[1]

    # Batch tile: multiple of 8 (f32 sublane), big enough to amortize per-step
    # overhead, clamped for small batches.  No padding of x: Pallas masks the
    # ragged last tile.
    tb = _round_up(min(block_batch, _round_up(B, 8)), 8)
    # v7x (2 TC/chip): make sure "parallel" has >= 2 grid steps to shard.
    if -(-B // tb) == 1 and B > 8:
        tb = _round_up(-(-B // 2), 8)
    grid = (-(-B // tb),)

    itemsize = jnp.dtype(x.dtype).itemsize
    w_itemsize = jnp.dtype(w1_t.dtype).itemsize
    bytes_accessed = (B * d_in * itemsize
                      + (d_in * hidden + hidden * out_dim) * w_itemsize
                      + (hidden + out_dim) * 4
                      + B * out_dim * 4)

    return pl.pallas_call(
        _mlp_kernel,
        out_shape=jax.ShapeDtypeStruct((B, out_dim), jnp.float32),
        grid=grid,
        in_specs=[
            # streamed per grid step (auto double-buffered)
            pl.BlockSpec((tb, d_in), lambda i: (i, 0)),
            # weights / biases: constant block index -> stay VMEM-resident
            pl.BlockSpec((d_in, hidden), lambda i: (0, 0)),
            pl.BlockSpec((1, hidden), lambda i: (0, 0)),
            pl.BlockSpec((hidden, out_dim), lambda i: (0, 0)),
            pl.BlockSpec((1, out_dim), lambda i: (0, 0)),
        ],
        out_specs=pl.BlockSpec((tb, out_dim), lambda i: (i, 0)),
        compiler_params=pltpu.CompilerParams(
            dimension_semantics=("parallel",),   # shard batch over v7x's 2 TCs
        ),
        cost_estimate=pl.CostEstimate(
            flops=2 * B * (d_in * hidden + hidden * out_dim),
            transcendentals=B * out_dim,
            bytes_accessed=bytes_accessed,
        ),
    )(x, w1_t, b1, w2_t, b2)


def init_params(key, input_dim, hidden_dim, output_dim, *, dtype=jnp.float32):
    """Deterministic init mirroring the PyTorch module's __init__.

    Weights are pre-transposed to (in, out); optional dtype (e.g. bf16) cast
    is done here once, not per forward call.
    """
    k1, k2, k3, k4 = jax.random.split(key, 4)

    # layer_1.weight: kaiming_uniform_(nonlinearity='relu')
    #   gain = sqrt(2), bound = gain * sqrt(3 / fan_in) = sqrt(6 / fan_in)
    bound1_w = math.sqrt(6.0 / input_dim)
    w1 = jax.random.uniform(k1, (hidden_dim, input_dim), jnp.float32,
                            -bound1_w, bound1_w)
    # layer_1.bias: default nn.Linear init, uniform(+-1/sqrt(fan_in))
    bound1_b = 1.0 / math.sqrt(input_dim)
    b1 = jax.random.uniform(k2, (1, hidden_dim), jnp.float32, -bound1_b, bound1_b)

    # layer_2: default nn.Linear init (kaiming_uniform_ with a=sqrt(5) gives the
    # same uniform(+-1/sqrt(fan_in)) bound) for both weight and bias.
    bound2 = 1.0 / math.sqrt(hidden_dim)
    w2 = jax.random.uniform(k3, (output_dim, hidden_dim), jnp.float32,
                            -bound2, bound2)
    b2 = jax.random.uniform(k4, (1, output_dim), jnp.float32, -bound2, bound2)

    # Pre-transpose (and optionally cast) weights for the kernel layout.
    return w1.T.astype(dtype), b1, w2.T.astype(dtype), b2


if __name__ == "__main__":
    input_dim, hidden_dim, output_dim = 32, 64, 16

    key = jax.random.PRNGKey(0)
    kx, kx2, kp = jax.random.split(key, 3)
    w1_t, b1, w2_t, b2 = init_params(kp, input_dim, hidden_dim, output_dim)

    def reference(x):
        return jax.nn.sigmoid(jnp.maximum(x @ w1_t + b1, 0.0) @ w2_t + b2)

    # Small demo batch (module-consistent shapes).
    x_small = jax.random.normal(kx, (8, input_dim), jnp.float32)
    out_small = jax.block_until_ready(mlp_forward(x_small, w1_t, b1, w2_t, b2))
    assert out_small.shape == (8, output_dim)
    assert jnp.allclose(out_small, reference(x_small), atol=2e-5, rtol=2e-5)

    # Non-multiple-of-tile batch: exercises the un-padded ragged-last-tile
    # path and the >=2-grid-step (v7x megacore) tile shrink.
    x_big = jax.random.normal(kx2, (250, input_dim), jnp.float32)
    out_big = jax.block_until_ready(mlp_forward(x_big, w1_t, b1, w2_t, b2))
    assert out_big.shape == (250, output_dim)
    assert jnp.allclose(out_big, reference(x_big), atol=2e-5, rtol=2e-5)

    # Optional bf16 matmul-input path (halved input/weight DMA, 2x MXU rate on
    # v6e/v7x); accumulation stays f32, so only a looser tolerance is needed.
    w1_bf, b1_bf, w2_bf, b2_bf = init_params(kp, input_dim, hidden_dim,
                                             output_dim, dtype=jnp.bfloat16)
    out_bf = jax.block_until_ready(
        mlp_forward(x_small.astype(jnp.bfloat16), w1_bf, b1_bf, w2_bf, b2_bf))
    assert out_bf.shape == (8, output_dim)
    assert jnp.allclose(out_bf, reference(x_small), atol=2e-2, rtol=2e-2)

    print("KERNEL_OK")
</pallas_src>

<mosaic_0001>
module attributes {stable_mosaic.version = 11 : i64} {
  func.func @_mlp_kernel(%arg0: i32, %arg1: memref<8x32xf32, #tpu.memory_space<vmem>>, %arg2: memref<32x64xf32, #tpu.memory_space<vmem>>, %arg3: memref<1x64xf32, #tpu.memory_space<vmem>>, %arg4: memref<64x16xf32, #tpu.memory_space<vmem>>, %arg5: memref<1x16xf32, #tpu.memory_space<vmem>>, %arg6: memref<8x16xf32, #tpu.memory_space<vmem>>) attributes {dimension_semantics = [#tpu.dimension_semantics<parallel>], iteration_bounds = array<i64: 1>, scalar_prefetch = 0 : i64, scratch_operands = 0 : i64, tpu.core_type = #tpu.core_type<tc>, window_params = [{transform_indices = @transform_0, window_bounds = array<i64: 8, 32>}, {pipeline_mode = #tpu.pipeline_mode<synchronous>, transform_indices = @transform_1, window_bounds = array<i64: 32, 64>}, {pipeline_mode = #tpu.pipeline_mode<synchronous>, transform_indices = @transform_2, window_bounds = array<i64: 1, 64>}, {pipeline_mode = #tpu.pipeline_mode<synchronous>, transform_indices = @transform_3, window_bounds = array<i64: 64, 16>}, {pipeline_mode = #tpu.pipeline_mode<synchronous>, transform_indices = @transform_4, window_bounds = array<i64: 1, 16>}, {transform_indices = @transform_5, window_bounds = array<i64: 8, 16>}]} {
    %c0 = arith.constant 0 : index
    %c0_0 = arith.constant 0 : index
    %0 = vector.load %arg1[%c0, %c0_0] : memref<8x32xf32, #tpu.memory_space<vmem>>, vector<8x32xf32>
    %c0_1 = arith.constant 0 : index
    %c0_2 = arith.constant 0 : index
    %1 = vector.load %arg2[%c0_1, %c0_2] : memref<32x64xf32, #tpu.memory_space<vmem>>, vector<32x64xf32>
    %cst = arith.constant dense<0.000000e+00> : vector<8x64xf32>
    %2 = tpu.matmul %0, %1, %cst {dimension_numbers = #tpu.dot_dimension_numbers<[1], [0], [0], [1], [0, 0, 1, 1], [], []>} : vector<8x32xf32>, vector<32x64xf32>, vector<8x64xf32> -> vector<8x64xf32>
    %c0_3 = arith.constant 0 : index
    %c0_4 = arith.constant 0 : index
    %3 = vector.load %arg3[%c0_3, %c0_4] : memref<1x64xf32, #tpu.memory_space<vmem>>, vector<1x64xf32>
    %4 = vector.broadcast %3 : vector<1x64xf32> to vector<8x64xf32>
    %5 = arith.addf %2, %4 : vector<8x64xf32>
    %cst_5 = arith.constant 0.000000e+00 : f32
    %6 = vector.broadcast %cst_5 : f32 to vector<8x64xf32>
    %7 = arith.maximumf %5, %6 : vector<8x64xf32>
    %c0_6 = arith.constant 0 : index
    %c0_7 = arith.constant 0 : index
    %8 = vector.load %arg4[%c0_6, %c0_7] : memref<64x16xf32, #tpu.memory_space<vmem>>, vector<64x16xf32>
    %cst_8 = arith.constant dense<0.000000e+00> : vector<8x16xf32>
    %9 = tpu.matmul %7, %8, %cst_8 {dimension_numbers = #tpu.dot_dimension_numbers<[1], [0], [0], [1], [0, 0, 1, 1], [], []>} : vector<8x64xf32>, vector<64x16xf32>, vector<8x16xf32> -> vector<8x16xf32>
    %c0_9 = arith.constant 0 : index
    %c0_10 = arith.constant 0 : index
    %10 = vector.load %arg5[%c0_9, %c0_10] : memref<1x16xf32, #tpu.memory_space<vmem>>, vector<1x16xf32>
    %11 = vector.broadcast %10 : vector<1x16xf32> to vector<8x16xf32>
    %12 = arith.addf %9, %11 : vector<8x16xf32>
    %13 = arith.negf %12 : vector<8x16xf32>
    %14 = math.exp %13 : vector<8x16xf32>
    %cst_11 = arith.constant 1.000000e+00 : f32
    %15 = vector.broadcast %cst_11 : f32 to vector<8x16xf32>
    %16 = arith.addf %15, %14 : vector<8x16xf32>
    %17 = arith.divf %15, %16 : vector<8x16xf32>
    %c0_12 = arith.constant 0 : index
    %c0_13 = arith.constant 0 : index
    %18 = vector.load %arg6[%c0_12, %c0_13] : memref<8x16xf32, #tpu.memory_space<vmem>>, vector<8x16xf32>
    tpu.vector_store %arg6[%c0_12, %c0_13], %17 {strides = array<i32>} : memref<8x16xf32, #tpu.memory_space<vmem>>, vector<8x16xf32>,
    return
  }
  func.func @transform_0(%arg0: i32) -> (i32, i32) {
    %c0_i32 = arith.constant 0 : i32
    %c0_i32_0 = arith.constant 0 : i32
    return %arg0, %c0_i32 : i32, i32
  }
  func.func @transform_1(%arg0: i32) -> (i32, i32) {
    %c0_i32 = arith.constant 0 : i32
    %c0_i32_0 = arith.constant 0 : i32
    %c0_i32_1 = arith.constant 0 : i32
    return %c0_i32, %c0_i32_0 : i32, i32
  }
  func.func @transform_2(%arg0: i32) -> (i32, i32) {
    %c0_i32 = arith.constant 0 : i32
    %c0_i32_0 = arith.constant 0 : i32
    %c0_i32_1 = arith.constant 0 : i32
    return %c0_i32, %c0_i32_0 : i32, i32
  }
  func.func @transform_3(%arg0: i32) -> (i32, i32) {
    %c0_i32 = arith.constant 0 : i32
    %c0_i32_0 = arith.constant 0 : i32
    %c0_i32_1 = arith.constant 0 : i32
    return %c0_i32, %c0_i32_0 : i32, i32
  }
  func.func @transform_4(%arg0: i32) -> (i32, i32) {
    %c0_i32 = arith.constant 0 : i32
    %c0_i32_0 = arith.constant 0 : i32
    %c0_i32_1 = arith.constant 0 : i32
    return %c0_i32, %c0_i32_0 : i32, i32
  }
  func.func @transform_5(%arg0: i32) -> (i32, i32) {
    %c0_i32 = arith.constant 0 : i32
    %c0_i32_0 = arith.constant 0 : i32
    return %arg0, %c0_i32 : i32, i32
  }
}

</mosaic_0001>

<llo_original>
// kernel: tpu_custom_call.1
$region0: #{tpu_custom_call.1}
  #allocation0 [shape = 'u32[]', space=smem, size = 0x4, offset = 0x4, fixed_abs, tag = 'smem constant byte address 0x4 - core index']
  #allocation1 [shape = 'u32[72,128]{1,0:T(1,128)}', space=vmem, size = 0x9000, scoped, tag = 'internal scratch']
  %s0 = inlined_call_operand.vmem [shape: f32[8,32], index: 0, kind: input, shape index: {}]
  %s1 = inlined_call_operand.vmem [shape: f32[32,64], index: 1, kind: input, shape index: {}]
  %s2 = inlined_call_operand.vmem [shape: f32[1,64], index: 2, kind: input, shape index: {}]
  %s3 = inlined_call_operand.vmem [shape: f32[64,16], index: 3, kind: input, shape index: {}]
  %s4 = inlined_call_operand.vmem [shape: f32[1,16], index: 4, kind: input, shape index: {}]
  %s5 = inlined_call_operand.hbm [shape: f32[8,16], index: 5, kind: output, shape index: {}]
  %s6 = sld [smem:[#allocation0]]
  $region30: #{tpu_custom_call.1} parent=0
    _
  %s8 = ssub.s32 1, %s6
  %s9 = scalar_select 0, %s8, %s6
  $region1: #{tpu_custom_call.1} parent=0
    #allocation2 [shape = 'u8[4096]{0}', space=vmem, size = 0x1000, scoped, tag = 'output window, operand 0, single buffered']
    #allocation3 [shape = 's32[1]{0}', space=sflag, size = 0x4, scoped, tag = 'scoped memory for tpu_custom_call.1']
    %10 = vsyncpa [#allocation3], 0
    // Predicated region
    $region2: #{tpu_custom_call.1} parent=1 // pred_check
      _
    $region3: #{tpu_custom_call.1} parent=1 // pred_check_branch
      %12 = sbr.rel (0) target = $region5
    $region4: #{tpu_custom_call.1} parent=1 // pred_region
      _
    $region5: #{tpu_custom_call.1} parent=1 // pred_fallthru
      _
    // Predicated region
    $region6: #{tpu_custom_call.1} parent=1 // pred_check
      _
    $region7: #{tpu_custom_call.1} parent=1 // pred_check_branch
      %14 = sbr.rel (0) target = $region9
    $region8: #{tpu_custom_call.1} parent=1 // pred_region
      _
    $region9: #{tpu_custom_call.1} parent=1 // pred_fallthru
      _
    // Predicated region
    $region10: #{tpu_custom_call.1} parent=1 // pred_check
      _
    $region11: #{tpu_custom_call.1} parent=1 // pred_check_branch
      %16 = sbr.rel (0) target = $region13
    $region12: #{tpu_custom_call.1} parent=1 // pred_region
      _
    $region13: #{tpu_custom_call.1} parent=1 // pred_fallthru
      _
    // Predicated region
    $region14: #{tpu_custom_call.1} parent=1 // pred_check
      _
    $region15: #{tpu_custom_call.1} parent=1 // pred_check_branch
      %18 = sbr.rel (0) target = $region17
    $region16: #{tpu_custom_call.1} parent=1 // pred_region
      _
    $region17: #{tpu_custom_call.1} parent=1 // pred_fallthru
      _
    // Predicated region
    $region18: #{tpu_custom_call.1} parent=1 // pred_check
      _
    $region19: #{tpu_custom_call.1} parent=1 // pred_check_branch
      %20 = sbr.rel (0) target = $region21
    $region20: #{tpu_custom_call.1} parent=1 // pred_region
      _
    $region21: #{tpu_custom_call.1} parent=1 // pred_fallthru
      _
    %v21 = vld [vmem:[%s0] sm:$0xff]
    %v22 = vld [vmem:[%s1] sm:$0xff]
    %v23 = vld [vmem:[%s1 + $0x8] sm:$0xff]
    %v24 = vld [vmem:[%s1 + $0x10] sm:$0xff]
    %v25 = vld [vmem:[%s1 + $0x18] sm:$0xff]
    %v26 = vld [vmem:[%s2] sm:$0x1]
    %v28 = vperm.slane %v26, 0
    %vm30 = vcmask 261120
    %v32 = vsel %vm30, %v21, 0
    %34 = vmatpush.msra.mxu0 0.0
    %35 = vmatpush.msra.mxu0 0.0
    %36 = vmatpush.msra.mxu0 0.0
    %37 = vmatpush.msra.mxu0 0.0
    %38 = vmatpush.msra.mxu0 0.0
    %39 = vmatpush.msra.mxu0 0.0
    %40 = vmatpush.msra.mxu0 0.0
    %41 = vmatpush.msra.mxu0 0.0
    %42 = vmatpush.msra.mxu0 0.0
    %43 = vmatpush.msra.mxu0 0.0
    %44 = vmatpush.msra.mxu0 0.0
    %45 = vmatpush.msra.mxu0 0.0
    %46 = vmatpush.msra.mxu0 %v25
    %47 = vmatpush.msra.mxu0 %v24
    %48 = vmatpush.msra.mxu0 %v23
    %49 = vmatpush.msra.mxu0 %v22
    %50 = vmatmul.f32.gmra.mxu0 %v32
    %v51 = vpop.f32.mrf.mxu0
    %v52 = vadd.f32 %v28, %v51
    %53 = vdwg.mxu0
    %v54 = vmax.f32 %v52, 0.0
    %v55 = vld [vmem:[%s3] sm:$0xff]
    %v56 = vld [vmem:[%s3 + $0x8] sm:$0xff]
    %v57 = vld [vmem:[%s3 + $0x10] sm:$0xff]
    %v58 = vld [vmem:[%s3 + $0x18] sm:$0xff]
    %v59 = vld [vmem:[%s3 + $0x20] sm:$0xff]
    %v60 = vld [vmem:[%s3 + $0x28] sm:$0xff]
    %v61 = vld [vmem:[%s3 + $0x30] sm:$0xff]
    %v62 = vld [vmem:[%s3 + $0x38] sm:$0xff]
    %v63 = vld [vmem:[%s4] sm:$0x1]
    %v65 = vperm.slane %v63, 0
    %vm67 = vcmask 523264
    %v69 = vsel %vm67, %v54, 0
    %71 = vmatpush.msra.mxu0 0.0
    %72 = vmatpush.msra.mxu0 0.0
    %73 = vmatpush.msra.mxu0 0.0
    %74 = vmatpush.msra.mxu0 0.0
    %75 = vmatpush.msra.mxu0 0.0
    %76 = vmatpush.msra.mxu0 0.0
    %77 = vmatpush.msra.mxu0 0.0
    %78 = vmatpush.msra.mxu0 0.0
    %79 = vmatpush.msra.mxu0 %v62
    %80 = vmatpush.msra.mxu0 %v61
    %81 = vmatpush.msra.mxu0 %v60
    %82 = vmatpush.msra.mxu0 %v59
    %83 = vmatpush.msra.mxu0 %v58
    %84 = vmatpush.msra.mxu0 %v57
    %85 = vmatpush.msra.mxu0 %v56
    %86 = vmatpush.msra.mxu0 %v55
    %87 = vmatmul.f32.gmra.mxu0 %v69
    %v88 = vpop.f32.mrf.mxu0
    %v89 = vadd.f32 %v65, %v88
    %90 = vdwg.mxu0
    %v91 = vxor.u32 %v89, 2147483648
    %v92 = vmul.f32 %v91, 1.442695
    %v93 = vpow.pop %v92
    %v94 = vadd.f32 %v93, 1.0
    %v95 = vrcp.pop %v94
    %v96 = vmul.f32 %v94, %v95
    %v97 = vsub.f32 1.0, %v96
    %v98 = vmul.f32 %v95, %v97
    %v99 = vadd.f32 %v95, %v98
    %vm100 = vweird.f32 %v94
    %vm101 = vweird.f32 %v95
    %vm102 = vmor %vm100, %vm101
    %v103 = vsel %vm102, %v95, %v99
    %v104 = vand.u32 2147483647, %v94
    %vm105 = vcmp.eq.f32.partialorder %v104, 8.507059e+37
    %v106 = vand.u32 %v94, 2147483648
    %v107 = vor.u32 1.1754944e-38, %v106
    %v108 = vsel %vm105, %v107, %v103
    %v109 = vmul.f32 1.0, %v108
    %vm110 = vcmask 130048
    %111 = vst.msk [vmem:[#allocation2] sm:$0xff] %vm110, %v109
    // Predicated region
    $region22: #{tpu_custom_call.1} parent=1 // pred_check
      _
    $region23: #{tpu_custom_call.1} parent=1 // pred_check_branch
      %113 = sbr.rel (0) target = $region25
    $region24: #{tpu_custom_call.1} parent=1 // pred_region
      %115 = vsyncadd [#allocation3], 0
      %s117 = sshll.u32 [#allocation2], 4
      %s118 = int_to_ptr.vmem [resolvable:$true] %s117
      %s119 = sshll.u32 %s5, 4
      %s120 = int_to_ptr.hbm [resolvable:$true] %s119
      %122 = dma.vmem_to_hbm [thread:$0]  %s118, 128, %s120, [#allocation3]
    $region25: #{tpu_custom_call.1} parent=1 // pred_fallthru
      _
    // Predicated region
    $region26: #{tpu_custom_call.1} parent=1 // pred_check
      _
    $region27: #{tpu_custom_call.1} parent=1 // pred_check_branch
      %124 = sbr.rel (0) target = $region29
    $region28: #{tpu_custom_call.1} parent=1 // pred_region
      %126 = dma.done [#allocation3], 128
    $region29: #{tpu_custom_call.1} parent=1 // pred_fallthru
      _
    %127 = vsyncpa [#allocation3], 1

</llo_original>
